<compile_context>
chip_gen: v7x
topology: tpu7x:2x2x1
jax: 0.10.0
libtpu: 0.0.40
codegen_flags: <defaults>
</compile_context>

<pallas_src>
import functools

import jax
import jax.numpy as jnp
import numpy as np
from jax.experimental import pallas as pl
from jax.experimental.pallas import tpu as pltpu


def _round_up(x, m):
    return ((x + m - 1) // m) * m


def _ipow(x, n):
    """x**n for a small positive integer n via repeated multiplies (no EUP exp/log)."""
    assert n >= 1
    result = None
    base = x
    while n > 0:
        if n & 1:
            result = base if result is None else result * base
        n >>= 1
        if n:
            base = base * base
    return result


def _dice_sums_kernel(pred_ref, tgt_ref, num_ref, den_ref, num_sc, den_sc, *,
                      hw, tile_hw, tiles_per_split, total_tiles, n_splits, p):
    c_split = pl.program_id(0)          # spatial core-split axis (parallel)
    j = pl.program_id(2)                # spatial tile within this split (reduction)
    g = c_split * tiles_per_split + j   # global spatial tile index

    @pl.when(j == 0)
    def _():
        num_sc[...] = jnp.zeros_like(num_sc)
        den_sc[...] = jnp.zeros_like(den_sc)

    def accumulate(masked):
        x = pred_ref[...].astype(jnp.float32)   # (1, C, tile_hw)
        t = tgt_ref[...].astype(jnp.float32)    # (1, C, tile_hw)

        # softmax over the channel (sublane) axis, per pixel (lane).
        m = jnp.max(x, axis=1, keepdims=True)
        e = jnp.exp(x - m)
        s = jnp.sum(e, axis=1, keepdims=True)           # (1, 1, tile_hw)
        sm = e * pl.reciprocal(s, approx=False)          # 1 recip / pixel + C muls

        prod = sm * t
        if p == 2:
            pw = sm * sm + t * t
        elif isinstance(p, int) and p >= 1:
            pw = _ipow(sm, p) + _ipow(t, p)              # VPU multiplies, no EUP
        else:
            pw = jnp.power(sm, float(p)) + jnp.power(t, float(p))

        if masked:
            # Padded tail lanes hold garbage (exp can give inf/NaN): use a select,
            # never multiply-by-mask (inf * 0 = NaN).
            lane = jax.lax.broadcasted_iota(jnp.int32, (1, 1, tile_hw), 2)
            valid = (g * tile_hw + lane) < hw
            prod = jnp.where(valid, prod, 0.0)
            pw = jnp.where(valid, pw, 0.0)

        # Per-lane partial sums: pure elementwise vreg adds, no XLU per tile.
        num_sc[...] += prod
        den_sc[...] += pw

    full_tiles = hw // tile_hw                            # tiles entirely in-bounds
    has_tail = (hw % tile_hw) != 0
    has_oob = (n_splits * tiles_per_split) > total_tiles  # some (split, j) map past HW

    if not has_tail and not has_oob:
        accumulate(masked=False)
    else:
        if full_tiles > 0:
            @pl.when(g < full_tiles)
            def _():
                accumulate(masked=False)
        if has_tail:
            @pl.when(jnp.logical_and(g >= full_tiles, g < total_tiles))
            def _():
                accumulate(masked=True)
        # g >= total_tiles: fully out-of-range tile -> skip (scratch stays as-is).

    @pl.when(j == tiles_per_split - 1)
    def _():
        c = num_sc.shape[1]
        num_ref[...] = jnp.sum(num_sc[...], axis=2, keepdims=True).reshape(1, 1, c, 1)
        den_ref[...] = jnp.sum(den_sc[...], axis=2, keepdims=True).reshape(1, 1, c, 1)


def dice_loss(predict, target, *, smooth=1.0, p=2, reduction="mean",
              weight=None, ignore_index=None,
              core_splits=None, max_tile_hw=None,
              vmem_budget_bytes=24 * 1024 * 1024):
    """Pallas implementation of DiceLoss.forward (softmax over dim=1 + BinaryDiceLoss)."""
    assert predict.shape == target.shape, "predict & target shape do not match"
    N, C = predict.shape[0], predict.shape[1]
    HW = int(np.prod(predict.shape[2:])) if predict.ndim > 2 else 1

    pred3 = predict.reshape(N, C, HW)   # free reshape, no transpose / extra HBM pass
    tgt3 = target.reshape(N, C, HW)

    # Lane-dense spatial tile, sized from the sublane-PADDED channel footprint:
    #   2 inputs x 2 pipeline buffers (input dtype) + 2 f32 lane-accumulator
    #   scratches + ~6 f32 elementwise temporaries (x, t, e, sm, prod, pw).
    itemsize = max(jnp.dtype(predict.dtype).itemsize, jnp.dtype(target.dtype).itemsize)
    c_pad = _round_up(C, 8)
    n_f32_blocks = 2 * 2 * max(1, itemsize // 4) + 2 + 6
    tile_hw = vmem_budget_bytes // (n_f32_blocks * c_pad * 4)
    tile_hw = max(512, tile_hw // 128 * 128)   # >=512 lanes ~85% of HBM roofline
    if max_tile_hw is not None:
        tile_hw = min(tile_hw, max(128, max_tile_hw // 128 * 128))
    tile_hw = min(tile_hw, _round_up(HW, 128))

    total_tiles = -(-HW // tile_hw)

    if core_splits is None:
        # Split the spatial reduction across 2 TensorCores (v7x) when the batch
        # axis alone gives no parallelism; elsewhere the extra grid axis is just
        # a cheap sequential loop.
        core_splits = 2 if (N < 2 and total_tiles >= 2) else 1
    n_splits = max(1, min(core_splits, total_tiles))
    tiles_per_split = -(-total_tiles // n_splits)

    grid = (n_splits, N, tiles_per_split)

    if n_splits * tiles_per_split > total_tiles:
        # Some (split, j) pairs fall past the last real tile: clamp the block index
        # (the kernel skips their accumulation anyway).
        def in_map(c, n, j):
            return (n, 0, jnp.minimum(c * tiles_per_split + j, total_tiles - 1))
    else:
        def in_map(c, n, j):
            return (n, 0, c * tiles_per_split + j)

    out_sd = jax.ShapeDtypeStruct((n_splits, N, C, 1), jnp.float32)

    num_s, den_s = pl.pallas_call(
        functools.partial(
            _dice_sums_kernel, hw=HW, tile_hw=tile_hw,
            tiles_per_split=tiles_per_split, total_tiles=total_tiles,
            n_splits=n_splits, p=p),
        out_shape=(out_sd, out_sd),
        grid_spec=pltpu.PrefetchScalarGridSpec(
            num_scalar_prefetch=0,
            grid=grid,
            in_specs=[
                pl.BlockSpec((1, C, tile_hw), in_map),
                pl.BlockSpec((1, C, tile_hw), in_map),
            ],
            out_specs=(
                pl.BlockSpec((1, 1, C, 1), lambda c, n, j: (c, n, 0, 0)),
                pl.BlockSpec((1, 1, C, 1), lambda c, n, j: (c, n, 0, 0)),
            ),
            scratch_shapes=[
                pltpu.VMEM((1, C, tile_hw), jnp.float32),  # per-lane num partials
                pltpu.VMEM((1, C, tile_hw), jnp.float32),  # per-lane den partials
            ],
        ),
        compiler_params=pltpu.CompilerParams(
            # split & batch axes can shard across TensorCores (v7x); spatial axis
            # is a reduction into resident scratch accumulators.
            dimension_semantics=("parallel", "parallel", "arbitrary"),
            vmem_limit_bytes=48 * 1024 * 1024,
        ),
    )(pred3, tgt3)

    num = jnp.sum(num_s, axis=0)[:, :, 0] + smooth   # (N, C)
    den = jnp.sum(den_s, axis=0)[:, :, 0] + smooth
    per = 1.0 - num / den                             # per-batch, per-class dice loss

    if reduction == "mean":
        per_class = per.mean(axis=0)      # (C,)
    elif reduction == "sum":
        per_class = per.sum(axis=0)       # (C,)
    elif reduction == "none":
        per_class = per                   # (N, C)
    else:
        raise ValueError("Unexpected reduction {}".format(reduction))

    if weight is not None:
        # (PyTorch source has a `self.weights` typo; we implement the intended scaling.)
        per_class = per_class * jnp.asarray(weight, jnp.float32)
    if ignore_index is not None:
        keep = (jnp.arange(C) != ignore_index).astype(jnp.float32)
        per_class = per_class * keep

    # DiceLoss sums over classes and divides by the number of classes.
    return jnp.sum(per_class, axis=-1) / C


def _reference(predict, target, smooth=1.0, p=2):
    """Plain-JAX mirror of the PyTorch DiceLoss (defaults: mean, no weight/ignore)."""
    N, C = predict.shape[0], predict.shape[1]
    pr = jax.nn.softmax(predict, axis=1)
    total = 0.0
    for i in range(C):
        pi = pr[:, i].reshape(N, -1)
        ti = target[:, i].reshape(N, -1)
        num = jnp.sum(pi * ti, axis=1) + smooth
        den = jnp.sum(pi ** p + ti ** p, axis=1) + smooth
        total = total + (1.0 - num / den).mean()
    return total / C


if __name__ == "__main__":
    key = jax.random.PRNGKey(0)
    k1, k2 = jax.random.split(key)

    def make_case(b, c, h, w):
        predict = jax.random.normal(k1, (b, c, h, w), dtype=jnp.float32)
        labels = jax.random.randint(k2, (b, h, w), 0, c)
        target = jnp.transpose(jax.nn.one_hot(labels, c, dtype=jnp.float32),
                               (0, 3, 1, 2))
        return predict, target

    # Case 1: b=2, c=4, h=w=16 (spatial size a multiple of 128 lanes; no masking).
    p1, t1 = make_case(2, 4, 16, 16)
    l1 = jax.block_until_ready(dice_loss(p1, t1))
    r1 = _reference(p1, t1)
    assert jnp.allclose(l1, r1, atol=1e-5, rtol=1e-4), (l1, r1)

    # Case 2: ragged spatial size (exercises the pl.when-gated masked tail tile).
    p2, t2 = make_case(2, 4, 10, 13)
    l2 = jax.block_until_ready(dice_loss(p2, t2))
    r2 = _reference(p2, t2)
    assert jnp.allclose(l2, r2, atol=1e-5, rtol=1e-4), (l2, r2)

    # Case 3: N=1 -> automatic 2-way spatial core split + masked tail on split 1.
    p3, t3 = make_case(1, 5, 9, 21)
    l3 = jax.block_until_ready(dice_loss(p3, t3, max_tile_hw=128))
    r3 = _reference(p3, t3)
    assert jnp.allclose(l3, r3, atol=1e-5, rtol=1e-4), (l3, r3)

    # Case 4: explicit split where one split's last tile is fully out of range
    # (exercises the clamped index_map + skip path).
    p4, t4 = make_case(2, 6, 15, 23)
    l4 = jax.block_until_ready(dice_loss(p4, t4, max_tile_hw=128, core_splits=2))
    r4 = _reference(p4, t4)
    assert jnp.allclose(l4, r4, atol=1e-5, rtol=1e-4), (l4, r4)

    print("KERNEL_OK")
</pallas_src>

<mosaic_0001>
module attributes {stable_mosaic.version = 11 : i64} {
  func.func @_dice_sums_kernel(%arg0: i32, %arg1: i32, %arg2: i32, %arg3: memref<1x4x256xf32, #tpu.memory_space<vmem>>, %arg4: memref<1x4x256xf32, #tpu.memory_space<vmem>>, %arg5: memref<1x1x4x1xf32, #tpu.memory_space<vmem>>, %arg6: memref<1x1x4x1xf32, #tpu.memory_space<vmem>>, %arg7: memref<1x4x256xf32, #tpu.memory_space<vmem>>, %arg8: memref<1x4x256xf32, #tpu.memory_space<vmem>>) attributes {dimension_semantics = [#tpu.dimension_semantics<parallel>, #tpu.dimension_semantics<parallel>, #tpu.dimension_semantics<arbitrary>], iteration_bounds = array<i64: 1, 2, 1>, scalar_prefetch = 0 : i64, scratch_operands = 2 : i64, tpu.core_type = #tpu.core_type<tc>, window_params = [{transform_indices = @transform_0, window_bounds = array<i64: 1, 4, 256>}, {transform_indices = @transform_1, window_bounds = array<i64: 1, 4, 256>}, {transform_indices = @transform_2, window_bounds = array<i64: 1, 1, 4, 1>}, {transform_indices = @transform_3, window_bounds = array<i64: 1, 1, 4, 1>}]} {
    %c0_i32 = arith.constant 0 : i32
    %0 = arith.cmpi eq, %arg2, %c0_i32 : i32
    %1 = arith.extui %0 : i1 to i32
    %c0_i32_0 = arith.constant 0 : i32
    %2 = arith.cmpi ne, %1, %c0_i32_0 : i32
    scf.if %2 {
      %cst_21 = arith.constant 0.000000e+00 : f32
      %28 = vector.broadcast %cst_21 : f32 to vector<1x4x256xf32>
      %c0_22 = arith.constant 0 : index
      %c0_23 = arith.constant 0 : index
      %c0_24 = arith.constant 0 : index
      %29 = vector.load %arg7[%c0_22, %c0_23, %c0_24] : memref<1x4x256xf32, #tpu.memory_space<vmem>>, vector<1x4x256xf32>
      tpu.vector_store %arg7[%c0_22, %c0_23, %c0_24], %28 {strides = array<i32>} : memref<1x4x256xf32, #tpu.memory_space<vmem>>, vector<1x4x256xf32>,
      %cst_25 = arith.constant 0.000000e+00 : f32
      %30 = vector.broadcast %cst_25 : f32 to vector<1x4x256xf32>
      %c0_26 = arith.constant 0 : index
      %c0_27 = arith.constant 0 : index
      %c0_28 = arith.constant 0 : index
      %31 = vector.load %arg8[%c0_26, %c0_27, %c0_28] : memref<1x4x256xf32, #tpu.memory_space<vmem>>, vector<1x4x256xf32>
      tpu.vector_store %arg8[%c0_26, %c0_27, %c0_28], %30 {strides = array<i32>} : memref<1x4x256xf32, #tpu.memory_space<vmem>>, vector<1x4x256xf32>,
    } else {
    }
    %c0 = arith.constant 0 : index
    %c0_1 = arith.constant 0 : index
    %c0_2 = arith.constant 0 : index
    %3 = vector.load %arg3[%c0, %c0_1, %c0_2] : memref<1x4x256xf32, #tpu.memory_space<vmem>>, vector<1x4x256xf32>
    %c0_3 = arith.constant 0 : index
    %c0_4 = arith.constant 0 : index
    %c0_5 = arith.constant 0 : index
    %4 = vector.load %arg4[%c0_3, %c0_4, %c0_5] : memref<1x4x256xf32, #tpu.memory_space<vmem>>, vector<1x4x256xf32>
    %cst = arith.constant dense<0xFF800000> : vector<1x256xf32>
    %5 = vector.multi_reduction <maximumf>, %3, %cst [1] : vector<1x4x256xf32> to vector<1x256xf32>
    %6 = vector.shape_cast %5 : vector<1x256xf32> to vector<1x1x256xf32>
    %7 = vector.broadcast %6 : vector<1x1x256xf32> to vector<1x4x256xf32>
    %8 = arith.subf %3, %7 : vector<1x4x256xf32>
    %9 = math.exp %8 : vector<1x4x256xf32>
    %cst_6 = arith.constant dense<0.000000e+00> : vector<1x256xf32>
    %10 = vector.multi_reduction <add>, %9, %cst_6 [1] : vector<1x4x256xf32> to vector<1x256xf32>
    %11 = vector.shape_cast %10 : vector<1x256xf32> to vector<1x1x256xf32>
    %12 = tpu.reciprocal %11 : vector<1x1x256xf32> -> vector<1x1x256xf32>
    %13 = vector.broadcast %12 : vector<1x1x256xf32> to vector<1x4x256xf32>
    %14 = arith.mulf %9, %13 : vector<1x4x256xf32>
    %15 = arith.mulf %14, %4 : vector<1x4x256xf32>
    %16 = arith.mulf %14, %14 : vector<1x4x256xf32>
    %17 = arith.mulf %4, %4 : vector<1x4x256xf32>
    %18 = arith.addf %16, %17 : vector<1x4x256xf32>
    %c0_7 = arith.constant 0 : index
    %c0_8 = arith.constant 0 : index
    %c0_9 = arith.constant 0 : index
    %19 = vector.load %arg7[%c0_7, %c0_8, %c0_9] : memref<1x4x256xf32, #tpu.memory_space<vmem>>, vector<1x4x256xf32>
    %20 = arith.addf %19, %15 : vector<1x4x256xf32>
    %c0_10 = arith.constant 0 : index
    %c0_11 = arith.constant 0 : index
    %c0_12 = arith.constant 0 : index
    %21 = vector.load %arg7[%c0_10, %c0_11, %c0_12] : memref<1x4x256xf32, #tpu.memory_space<vmem>>, vector<1x4x256xf32>
    tpu.vector_store %arg7[%c0_10, %c0_11, %c0_12], %20 {strides = array<i32>} : memref<1x4x256xf32, #tpu.memory_space<vmem>>, vector<1x4x256xf32>,
    %c0_13 = arith.constant 0 : index
    %c0_14 = arith.constant 0 : index
    %c0_15 = arith.constant 0 : index
    %22 = vector.load %arg8[%c0_13, %c0_14, %c0_15] : memref<1x4x256xf32, #tpu.memory_space<vmem>>, vector<1x4x256xf32>
    %23 = arith.addf %22, %18 : vector<1x4x256xf32>
    %c0_16 = arith.constant 0 : index
    %c0_17 = arith.constant 0 : index
    %c0_18 = arith.constant 0 : index
    %24 = vector.load %arg8[%c0_16, %c0_17, %c0_18] : memref<1x4x256xf32, #tpu.memory_space<vmem>>, vector<1x4x256xf32>
    tpu.vector_store %arg8[%c0_16, %c0_17, %c0_18], %23 {strides = array<i32>} : memref<1x4x256xf32, #tpu.memory_space<vmem>>, vector<1x4x256xf32>,
    %c0_i32_19 = arith.constant 0 : i32
    %25 = arith.cmpi eq, %arg2, %c0_i32_19 : i32
    %26 = arith.extui %25 : i1 to i32
    %c0_i32_20 = arith.constant 0 : i32
    %27 = arith.cmpi ne, %26, %c0_i32_20 : i32
    scf.if %27 {
      %c0_21 = arith.constant 0 : index
      %c0_22 = arith.constant 0 : index
      %c0_23 = arith.constant 0 : index
      %28 = vector.load %arg7[%c0_21, %c0_22, %c0_23] : memref<1x4x256xf32, #tpu.memory_space<vmem>>, vector<1x4x256xf32>
      %cst_24 = arith.constant dense<0.000000e+00> : vector<1x4xf32>
      %29 = vector.multi_reduction <add>, %28, %cst_24 [2] : vector<1x4x256xf32> to vector<1x4xf32>
      %30 = vector.shape_cast %29 : vector<1x4xf32> to vector<1x4x1xf32>
      %31 = vector.shape_cast %30 : vector<1x4x1xf32> to vector<1x1x4x1xf32>
      %c0_25 = arith.constant 0 : index
      %c0_26 = arith.constant 0 : index
      %c0_27 = arith.constant 0 : index
      %c0_28 = arith.constant 0 : index
      %32 = vector.load %arg5[%c0_25, %c0_26, %c0_27, %c0_28] : memref<1x1x4x1xf32, #tpu.memory_space<vmem>>, vector<1x1x4x1xf32>
      tpu.vector_store %arg5[%c0_25, %c0_26, %c0_27, %c0_28], %31 {strides = array<i32>} : memref<1x1x4x1xf32, #tpu.memory_space<vmem>>, vector<1x1x4x1xf32>,
      %c0_29 = arith.constant 0 : index
      %c0_30 = arith.constant 0 : index
      %c0_31 = arith.constant 0 : index
      %33 = vector.load %arg8[%c0_29, %c0_30, %c0_31] : memref<1x4x256xf32, #tpu.memory_space<vmem>>, vector<1x4x256xf32>
      %cst_32 = arith.constant dense<0.000000e+00> : vector<1x4xf32>
      %34 = vector.multi_reduction <add>, %33, %cst_32 [2] : vector<1x4x256xf32> to vector<1x4xf32>
      %35 = vector.shape_cast %34 : vector<1x4xf32> to vector<1x4x1xf32>
      %36 = vector.shape_cast %35 : vector<1x4x1xf32> to vector<1x1x4x1xf32>
      %c0_33 = arith.constant 0 : index
      %c0_34 = arith.constant 0 : index
      %c0_35 = arith.constant 0 : index
      %c0_36 = arith.constant 0 : index
      %37 = vector.load %arg6[%c0_33, %c0_34, %c0_35, %c0_36] : memref<1x1x4x1xf32, #tpu.memory_space<vmem>>, vector<1x1x4x1xf32>
      tpu.vector_store %arg6[%c0_33, %c0_34, %c0_35, %c0_36], %36 {strides = array<i32>} : memref<1x1x4x1xf32, #tpu.memory_space<vmem>>, vector<1x1x4x1xf32>,
    } else {
    }
    return
  }
  func.func @transform_0(%arg0: i32, %arg1: i32, %arg2: i32) -> (i32, i32, i32) {
    %c1_i32 = arith.constant 1 : i32
    %0 = arith.muli %arg0, %c1_i32 : i32
    %1 = arith.addi %0, %arg2 : i32
    %c0_i32 = arith.constant 0 : i32
    %c0_i32_0 = arith.constant 0 : i32
    return %arg1, %c0_i32, %1 : i32, i32, i32
  }
  func.func @transform_1(%arg0: i32, %arg1: i32, %arg2: i32) -> (i32, i32, i32) {
    %c1_i32 = arith.constant 1 : i32
    %0 = arith.muli %arg0, %c1_i32 : i32
    %1 = arith.addi %0, %arg2 : i32
    %c0_i32 = arith.constant 0 : i32
    %c0_i32_0 = arith.constant 0 : i32
    return %arg1, %c0_i32, %1 : i32, i32, i32
  }
  func.func @transform_2(%arg0: i32, %arg1: i32, %arg2: i32) -> (i32, i32, i32, i32) {
    %c0_i32 = arith.constant 0 : i32
    %c0_i32_0 = arith.constant 0 : i32
    %c0_i32_1 = arith.constant 0 : i32
    return %arg0, %arg1, %c0_i32, %c0_i32_0 : i32, i32, i32, i32
  }
  func.func @transform_3(%arg0: i32, %arg1: i32, %arg2: i32) -> (i32, i32, i32, i32) {
    %c0_i32 = arith.constant 0 : i32
    %c0_i32_0 = arith.constant 0 : i32
    %c0_i32_1 = arith.constant 0 : i32
    return %arg0, %arg1, %c0_i32, %c0_i32_0 : i32, i32, i32, i32
  }
}

</mosaic_0001>

<llo_original>
// kernel: tpu_custom_call.1
$region0: #{tpu_custom_call.1}
  #allocation0 [shape = 'u32[]', space=smem, size = 0x4, offset = 0x4, fixed_abs, tag = 'smem constant byte address 0x4 - core index']
  #allocation1 [shape = 'u32[144,128]{1,0:T(1,128)}', space=vmem, size = 0x12000, scoped, tag = 'internal scratch']
  #allocation2 [shape = 'f32[1,4,256]{2,1,0:T(4,128)}', space=vmem, size = 0x1000, scoped, tag = 'scratch operand']
  #allocation3 [shape = 'f32[1,4,256]{2,1,0:T(4,128)}', space=vmem, size = 0x1000, scoped, tag = 'scratch operand']
  %s0 = inlined_call_operand.hbm [shape: f32[2,4,256], index: 0, kind: input, shape index: {}]
  %s1 = inlined_call_operand.hbm [shape: f32[2,4,256], index: 1, kind: input, shape index: {}]
  %s2 = inlined_call_operand.vmem [shape: f32[1,2,4,1], index: 2, kind: output, shape index: {0}]
  %s3 = inlined_call_operand.vmem [shape: f32[1,2,4,1], index: 3, kind: output, shape index: {1}]
  %4 = xla_tuple %s2, %s3
  %s5 = sld [smem:[#allocation0]]
  $region65: #{tpu_custom_call.1} parent=0
    _
  %s7 = ssub.s32 1, %s5
  %s8 = scalar_select 0, %s7, %s5
  $region1: #{tpu_custom_call.1} parent=0
    #allocation4 [shape = 'u8[8192]{0}', space=vmem, size = 0x2000, scoped, tag = 'input window, operand 0']
    #allocation5 [shape = 's32[2]{0}', space=sflag, size = 0x8, scoped, tag = 'scoped memory for tpu_custom_call.1']
    #allocation6 [shape = 'u8[8192]{0}', space=vmem, size = 0x2000, scoped, tag = 'input window, operand 1']
    #allocation7 [shape = 's32[2]{0}', space=sflag, size = 0x8, scoped, tag = 'scoped memory for tpu_custom_call.1']
    %9 = vsyncpa [#allocation5], 0
    %s10 = scalar_lea.sflag [#allocation5], 1
    %11 = vsyncpa %s10, 0
    %12 = vsyncpa [#allocation7], 0
    %s13 = scalar_lea.sflag [#allocation7], 1
    %14 = vsyncpa %s13, 0
    loop: start=0, step=1, limit=4
    $region2: #{tpu_custom_call.1} parent=1 // loop_pre_header
      _
    $region3: #{tpu_custom_call.1} parent=1 // loop_header
      %s16 = sphi 0, %s20
      %p17 = scmp.ge.s32.totalorder %s16, 4
      %s23 = sphi 0, %s42
      %s24 = sphi 0, %s38
      %s25 = sphi 0, %s34
      %s26 = sphi 0, %s23
      %s27 = sphi 0, %s24
      %s28 = sphi 0, %s25
      %s29 = sphi 0, %s26
      %s30 = sphi 0, %s27
      %s31 = sphi 0, %s28
      %s49 = sphi 0, %s51
      %s52 = sphi 0, %s49
      %s53 = sphi 0, %s52
      %s69 = sphi 0, %s53
      %s79 = sphi 0, %s81
      %s82 = sphi 0, %s79
      %s83 = sphi 0, %s82
      %s99 = sphi 0, %s83
      %s107 = sphi 0, %s109
      %s110 = sphi 0, %s107
      %s111 = sphi 0, %s110
      %s127 = sphi 0, %s111
      %s135 = sphi 0, %s137
      %s138 = sphi 0, %s135
      %s139 = sphi 0, %s138
      %s155 = sphi 0, %s139
    $region4: #{tpu_custom_call.1} parent=1 // loop_header_branch
      %19 = sbr.rel (%p17) target = $region8
    $region5: #{tpu_custom_call.1} parent=1 // loop_body
      %s21 = ssub.s32 %s16, 1
      %s22 = ssub.s32 %s16, 2
      %s32 = sadd.s32 1, %s25
      %p33 = scmp.ge.s32.totalorder %s32, 1
      %s34 = scalar_select %p33, 0, %s32
      %s35 = sadd.s32 1, %s24
      %s36 = scalar_select %p33, %s35, %s24
      %p37 = scmp.ge.s32.totalorder %s36, 2
      %s38 = scalar_select %p37, 0, %s36
      %s39 = sadd.s32 1, %s23
      %s40 = scalar_select %p37, %s39, %s23
      %p41 = scmp.ge.s32.totalorder %s40, 1
      %s42 = scalar_select %p41, 0, %s40
      %s43 = sadd.s32 %s23, %s25
      %s44 = sadd.s32 %s42, %s34
      %s45 = ssub.s32 %s24, %s38
      %s46 = ssub.s32 %s43, %s44
      %s47 = sor.u32 %s45, %s46
      %p48 = scmp.eq.s32.totalorder %s47, 0
      %s50 = sadd.s32 %s49, 1
      %s51 = scalar_select %p48, %s49, %s50
      %p54 = pneg %p48
      %p55 = scmp.eq.s32.totalorder %s16, 1
      %p56 = por %p54, %p55
      %p57 = scmp.ne.s32.totalorder %s49, %s52
      %p58 = scmp.eq.s32.totalorder %s16, 0
      %p59 = por %p57, %p58
      %p60 = scmp.ne.s32.totalorder %s49, %s52
      %p61 = scmp.eq.s32.totalorder %s21, 1
      %p62 = por %p60, %p61
      %p63 = scmp.ne.s32.totalorder %s52, %s53
      %p64 = scmp.eq.s32.totalorder %s21, 0
      %p65 = por %p63, %p64
      %p66 = scmp.ne.s32.totalorder %s52, %s53
      %p67 = scmp.eq.s32.totalorder %s22, 1
      %p68 = por %p66, %p67
      %p70 = scmp.ne.s32.totalorder %s53, %s69
      %p71 = scmp.eq.s32.totalorder %s22, 0
      %p72 = por %p70, %p71
      %s73 = sadd.s32 %s23, %s25
      %s74 = sadd.s32 %s42, %s34
      %s75 = ssub.s32 %s24, %s38
      %s76 = ssub.s32 %s73, %s74
      %s77 = sor.u32 %s75, %s76
      %p78 = scmp.eq.s32.totalorder %s77, 0
      %s80 = sadd.s32 %s79, 1
      %s81 = scalar_select %p78, %s79, %s80
      %p84 = pneg %p78
      %p85 = scmp.eq.s32.totalorder %s16, 1
      %p86 = por %p84, %p85
      %p87 = scmp.ne.s32.totalorder %s79, %s82
      %p88 = scmp.eq.s32.totalorder %s16, 0
      %p89 = por %p87, %p88
      %p90 = scmp.ne.s32.totalorder %s79, %s82
      %p91 = scmp.eq.s32.totalorder %s21, 1
      %p92 = por %p90, %p91
      %p93 = scmp.ne.s32.totalorder %s82, %s83
      %p94 = scmp.eq.s32.totalorder %s21, 0
      %p95 = por %p93, %p94
      %p96 = scmp.ne.s32.totalorder %s82, %s83
      %p97 = scmp.eq.s32.totalorder %s22, 1
      %p98 = por %p96, %p97
      %p100 = scmp.ne.s32.totalorder %s83, %s99
      %p101 = scmp.eq.s32.totalorder %s22, 0
      %p102 = por %p100, %p101
      %s103 = ssub.s32 %s23, %s42
      %s104 = ssub.s32 %s24, %s38
      %s105 = sor.u32 %s103, %s104
      %p106 = scmp.eq.s32.totalorder %s105, 0
      %s108 = sadd.s32 %s107, 1
      %s109 = scalar_select %p106, %s107, %s108
      %p112 = pneg %p106
      %p113 = scmp.eq.s32.totalorder %s16, 1
      %p114 = por %p112, %p113
      %p115 = scmp.ne.s32.totalorder %s107, %s110
      %p116 = scmp.eq.s32.totalorder %s16, 0
      %p117 = por %p115, %p116
      %p118 = scmp.ne.s32.totalorder %s107, %s110
      %p119 = scmp.eq.s32.totalorder %s21, 1
      %p120 = por %p118, %p119
      %p121 = scmp.ne.s32.totalorder %s110, %s111
      %p122 = scmp.eq.s32.totalorder %s21, 0
      %p123 = por %p121, %p122
      %p124 = scmp.ne.s32.totalorder %s110, %s111
      %p125 = scmp.eq.s32.totalorder %s22, 1
      %p126 = por %p124, %p125
      %p128 = scmp.ne.s32.totalorder %s111, %s127
      %p129 = scmp.eq.s32.totalorder %s22, 0
      %p130 = por %p128, %p129
      %s131 = ssub.s32 %s23, %s42
      %s132 = ssub.s32 %s24, %s38
      %s133 = sor.u32 %s131, %s132
      %p134 = scmp.eq.s32.totalorder %s133, 0
      %s136 = sadd.s32 %s135, 1
      %s137 = scalar_select %p134, %s135, %s136
      %p140 = pneg %p134
      %p141 = scmp.eq.s32.totalorder %s16, 1
      %p142 = por %p140, %p141
      %p143 = scmp.ne.s32.totalorder %s135, %s138
      %p144 = scmp.eq.s32.totalorder %s16, 0
      %p145 = por %p143, %p144
      %p146 = scmp.ne.s32.totalorder %s135, %s138
      %p147 = scmp.eq.s32.totalorder %s21, 1
      %p148 = por %p146, %p147
      %p149 = scmp.ne.s32.totalorder %s138, %s139
      %p150 = scmp.eq.s32.totalorder %s21, 0
      %p151 = por %p149, %p150
      %p152 = scmp.ne.s32.totalorder %s138, %s139
      %p153 = scmp.eq.s32.totalorder %s22, 1
      %p154 = por %p152, %p153
      %p156 = scmp.ne.s32.totalorder %s139, %s155
      %p157 = scmp.eq.s32.totalorder %s22, 0
      %p158 = por %p156, %p157
      %p159 = scmp.le.s32.totalorder 1, %s16
      %p160 = scmp.lt.s32.totalorder %s16, 3
      %p161 = pnand %p159, %p160
      %p162 = pneg %p161
      // Predicated region
      $region9: #{tpu_custom_call.1} parent=5 // pred_check
        _
      $region10: #{tpu_custom_call.1} parent=5 // pred_check_branch
        %164 = sbr.rel (%p161) target = $region12
      $region11: #{tpu_custom_call.1} parent=5 // pred_region
        %s165 = ssub.s32 %s16, 1
      $region12: #{tpu_custom_call.1} parent=5 // pred_fallthru
        _
      %p166 = scmp.lt.s32.totalorder %s16, 2
      // Predicated region
      $region13: #{tpu_custom_call.1} parent=5 // pred_check
        %p167 = pneg %p166
      $region14: #{tpu_custom_call.1} parent=5 // pred_check_branch
        %169 = sbr.rel (%p167) target = $region16
      $region15: #{tpu_custom_call.1} parent=5 // pred_region
        // Predicated region
        $region17: #{tpu_custom_call.1} parent=15 // pred_check
          %p170 = pneg %p59
        $region18: #{tpu_custom_call.1} parent=15 // pred_check_branch
          %172 = sbr.rel (%p170) target = $region20
        $region19: #{tpu_custom_call.1} parent=15 // pred_region
          %s173 = sand.u32 %s49, 1
          %s174 = scalar_lea.sflag [#allocation5], %s173
          %s175 = sand.u32 %s49, 1
          %s176 = smul.addr %s175, 8
          %s177 = scalar_lea.vmem [#allocation4], %s176
          %s178 = sadd.s32 %s23, %s25
          %s179 = smul.u32 2, %s178
          %s181 = ssub.s32 128, 128
          %182 = vsyncadd %s174, %s181
          %s183 = smul.addr %s24, 2
          %s184 = sadd.s32 %s179, %s183
          %s185 = smul.addr %s184, 64
          %s186 = scalar_lea.hbm %s0, %s185
          %s188 = sshll.u32 %s177, 4
          %s189 = int_to_ptr.vmem [resolvable:$true] %s188
          %191 = dma.hbm_to_vmem [thread:$0]  %s186, 128, %s189, %s174
        $region20: #{tpu_custom_call.1} parent=15 // pred_fallthru
          _
        // Predicated region
        $region21: #{tpu_custom_call.1} parent=15 // pred_check
          %p192 = pneg %p89
        $region22: #{tpu_custom_call.1} parent=15 // pred_check_branch
          %194 = sbr.rel (%p192) target = $region24
        $region23: #{tpu_custom_call.1} parent=15 // pred_region
          %s195 = sand.u32 %s79, 1
          %s196 = scalar_lea.sflag [#allocation7], %s195
          %s197 = sand.u32 %s79, 1
          %s198 = smul.addr %s197, 8
          %s199 = scalar_lea.vmem [#allocation6], %s198
          %s200 = sadd.s32 %s23, %s25
          %s201 = smul.u32 2, %s200
          %s203 = ssub.s32 128, 128
          %204 = vsyncadd %s196, %s203
          %s205 = smul.addr %s24, 2
          %s206 = sadd.s32 %s201, %s205
          %s207 = smul.addr %s206, 64
          %s208 = scalar_lea.hbm %s1, %s207
          %s210 = sshll.u32 %s199, 4
          %s211 = int_to_ptr.vmem [resolvable:$true] %s210
          %213 = dma.hbm_to_vmem [thread:$0]  %s208, 128, %s211, %s196
        $region24: #{tpu_custom_call.1} parent=15 // pred_fallthru
          _
      $region16: #{tpu_custom_call.1} parent=5 // pred_fallthru
        _
      %p214 = scmp.le.s32.totalorder 1, %s16
      %p215 = scmp.lt.s32.totalorder %s16, 3
      %p216 = pnand %p214, %p215
      %p217 = pneg %p216
      // Predicated region
      $region25: #{tpu_custom_call.1} parent=5 // pred_check
        _
      $region26: #{tpu_custom_call.1} parent=5 // pred_check_branch
        %219 = sbr.rel (%p216) target = $region28
      $region27: #{tpu_custom_call.1} parent=5 // pred_region
        %s220 = ssub.s32 %s16, 1
        %s221 = sand.u32 %s52, 1
        %s222 = scalar_lea.sflag [#allocation5], %s221
        %s223 = sand.u32 %s52, 1
        %s224 = smul.addr %s223, 8
        %s225 = scalar_lea.vmem [#allocation4], %s224
        // Predicated region
        $region29: #{tpu_custom_call.1} parent=27 // pred_check
          %p226 = pneg %p65
        $region30: #{tpu_custom_call.1} parent=27 // pred_check_branch
          %228 = sbr.rel (%p226) target = $region32
        $region31: #{tpu_custom_call.1} parent=27 // pred_region
          %229 = dma.done %s222, 128
        $region32: #{tpu_custom_call.1} parent=27 // pred_fallthru
          _
        %s230 = sand.u32 %s82, 1
        %s231 = scalar_lea.sflag [#allocation7], %s230
        %s232 = sand.u32 %s82, 1
        %s233 = smul.addr %s232, 8
        %s234 = scalar_lea.vmem [#allocation6], %s233
        // Predicated region
        $region33: #{tpu_custom_call.1} parent=27 // pred_check
          %p235 = pneg %p95
        $region34: #{tpu_custom_call.1} parent=27 // pred_check_branch
          %237 = sbr.rel (%p235) target = $region36
        $region35: #{tpu_custom_call.1} parent=27 // pred_region
          %238 = dma.done %s231, 128
        $region36: #{tpu_custom_call.1} parent=27 // pred_fallthru
          _
        %s239 = sand.u32 %s52, 1
        %s240 = scalar_lea.sflag [#allocation5], %s239
        %s241 = sand.u32 %s52, 1
        %s242 = smul.addr %s241, 8
        %s243 = scalar_lea.vmem [#allocation4], %s242
        %p244 = pneg %p65
        %p245 = pneg %p62
        %s246 = sand.u32 %s82, 1
        %s247 = scalar_lea.sflag [#allocation7], %s246
        %s248 = sand.u32 %s82, 1
        %s249 = smul.addr %s248, 8
        %s250 = scalar_lea.vmem [#allocation6], %s249
        %p251 = pneg %p95
        %p252 = pneg %p92
        %p253 = pneg %p123
        %p254 = pneg %p120
        %p255 = scmp.lt.s32.totalorder %s26, 0
        %s256 = scalar_select %p255, %s26, 0
        %p257 = scmp.lt.s32.totalorder %s27, 1
        %s258 = scalar_select %p257, %s27, 1
        %s259 = smul.addr %s256, 2
        %s260 = sadd.s32 %s258, %s259
        %s261 = smul.addr %s260, 4
        %s262 = scalar_lea.vmem %s2, %s261
        %p263 = pneg %p151
        %p264 = pneg %p148
        %p265 = scmp.lt.s32.totalorder %s26, 0
        %s266 = scalar_select %p265, %s26, 0
        %p267 = scmp.lt.s32.totalorder %s27, 1
        %s268 = scalar_select %p267, %s27, 1
        %s269 = smul.addr %s266, 2
        %s270 = sadd.s32 %s268, %s269
        %s271 = smul.addr %s270, 4
        %s272 = scalar_lea.vmem %s3, %s271
        %s273 = sadd.s32 %s26, %s28
        %s274 = smul.u32 2, %s273
        %s275 = sadd.s32 %s26, %s28
        %s276 = smul.u32 2, %s275
        %p277 = scmp.lt.s32.totalorder %s26, 0
        %s278 = scalar_select %p277, %s26, 0
        %p279 = scmp.lt.s32.totalorder %s27, 1
        %s280 = scalar_select %p279, %s27, 1
        %s281 = smul.addr %s278, 2
        %s282 = sadd.s32 %s280, %s281
        %s283 = smul.addr %s282, 4
        %s284 = scalar_lea.vmem %s2, %s283
        %p285 = scmp.lt.s32.totalorder %s26, 0
        %s286 = scalar_select %p285, %s26, 0
        %p287 = scmp.lt.s32.totalorder %s27, 1
        %s288 = scalar_select %p287, %s27, 1
        %s289 = smul.addr %s286, 2
        %s290 = sadd.s32 %s288, %s289
        %s291 = smul.addr %s290, 4
        %s292 = scalar_lea.vmem %s3, %s291
        %p293 = scmp.eq.s32.totalorder %s28, 0
        // Predicated region
        $region37: #{tpu_custom_call.1} parent=27 // pred_check
          %p294 = pneg %p293
        $region38: #{tpu_custom_call.1} parent=27 // pred_check_branch
          %296 = sbr.rel (%p294) target = $region40
        $region39: #{tpu_custom_call.1} parent=27 // pred_region
          %297 = vst [vmem:[#allocation2] sm:$0xff] 0.0
          %298 = vst [vmem:[#allocation3] sm:$0xff] 0.0
        $region40: #{tpu_custom_call.1} parent=27 // pred_fallthru
          _
        %v299 = vld [vmem:[%s225] sm:$0xff]
        %v300 = vld [vmem:[%s234] sm:$0xff]
        %v302 = vcombine.high %v299, %v299
        %vm304 = vcmask 1043456
        %v305 = vsel %vm304, %v299, -inf
        %v306 = vrot.slane %v305, 4
        %v307 = vmax.f32 %v305, %v306
        %v308 = vrot.slane %v307, 2
        %v309 = vmax.f32 %v307, %v308
        %v310 = vrot.slane %v309, 1
        %v311 = vmax.f32 %v309, %v310
        %v312 = vsel %vm304, %v302, -inf
        %v313 = vrot.slane %v312, 4
        %v314 = vmax.f32 %v312, %v313
        %v315 = vrot.slane %v314, 2
        %v316 = vmax.f32 %v314, %v315
        %v317 = vrot.slane %v316, 1
        %v318 = vmax.f32 %v316, %v317
        %v321 = vcombine.low %v311, %v318
        %v323 = vsub.f32 %v299, %v321
        %v324 = vmul.f32 %v323, 1.442695
        %v325 = vpow.pop %v324
        %v327 = vcombine.high %v325, %v325
        %v329 = vsel %vm304, %v325, 0.0
        %v330 = vrot.slane %v329, 4
        %v331 = vadd.f32 %v329, %v330
        %v332 = vrot.slane %v331, 2
        %v333 = vadd.f32 %v331, %v332
        %v334 = vrot.slane %v333, 1
        %v335 = vadd.f32 %v333, %v334
        %v336 = vsel %vm304, %v327, 0.0
        %v337 = vrot.slane %v336, 4
        %v338 = vadd.f32 %v336, %v337
        %v339 = vrot.slane %v338, 2
        %v340 = vadd.f32 %v338, %v339
        %v341 = vrot.slane %v340, 1
        %v342 = vadd.f32 %v340, %v341
        %v343 = vrcp.pop %v335
        %v344 = vrcp.pop %v342
        %v347 = vcombine.low %v343, %v344
        %v349 = vmul.f32 %v325, %v347
        %v350 = vmul.f32 %v349, %v300
        %v351 = vmul.f32 %v349, %v349
        %v352 = vmul.f32 %v300, %v300
        %v353 = vadd.f32 %v351, %v352
        %v354 = vld [vmem:[#allocation2] sm:$0xff]
        %v355 = vadd.f32 %v354, %v350
        %356 = vst [vmem:[#allocation2] sm:$0xff] %v355
        %v357 = vld [vmem:[#allocation3] sm:$0xff]
        %v358 = vadd.f32 %v357, %v353
        %359 = vst [vmem:[#allocation3] sm:$0xff] %v358
        // Predicated region
        $region41: #{tpu_custom_call.1} parent=27 // pred_check
          %p360 = pneg %p293
        $region42: #{tpu_custom_call.1} parent=27 // pred_check_branch
          %362 = sbr.rel (%p360) target = $region44
        $region43: #{tpu_custom_call.1} parent=27 // pred_region
          %v363 = vld [vmem:[#allocation2] sm:$0xff]
          %v365 = vcombine.high %v363, %v363
          %v367 = vsel %vm304, %v363, 0.0
          %v368 = vsel %vm304, %v365, 0.0
          %v369 = vadd.f32 %v367, %v368
          %370 = vadd.xlane.f32.xlu0 %v369
          %v371 = vpop.xlane.xlu0 %370
          %vm372 = vcmask 3072
          %373 = vst.msk [vmem:[%s284] sm:$0xf] %vm372, %v371
          %v374 = vld [vmem:[#allocation3] sm:$0xff]
          %v376 = vcombine.high %v374, %v374
          %v378 = vsel %vm304, %v374, 0.0
          %v379 = vsel %vm304, %v376, 0.0
          %v380 = vadd.f32 %v378, %v379
          %381 = vadd.xlane.f32.xlu0 %v380
          %v382 = vpop.xlane.xlu0 %381
          %383 = vst.msk [vmem:[%s292] sm:$0xf] %vm372, %v382
        $region44: #{tpu_custom_call.1} parent=27 // pred_fallthru
          _
        %p384 = scmp.lt.s32.totalorder %s26, 0
        %s385 = scalar_select %p384, %s26, 0
        %p386 = scmp.lt.s32.totalorder %s27, 1
        %s387 = scalar_select %p386, %s27, 1
        %s388 = smul.addr %s385, 2
        %s389 = sadd.s32 %s387, %s388
        %s390 = smul.addr %s389, 4
        %s391 = scalar_lea.vmem %s2, %s390
        %p392 = scmp.lt.s32.totalorder %s26, 0
        %s393 = scalar_select %p392, %s26, 0
        %p394 = scmp.lt.s32.totalorder %s27, 1
        %s395 = scalar_select %p394, %s27, 1
        %s396 = smul.addr %s393, 2
        %s397 = sadd.s32 %s395, %s396
        %s398 = smul.addr %s397, 4
        %s399 = scalar_lea.vmem %s3, %s398
        // Predicated region
        $region45: #{tpu_custom_call.1} parent=27 // pred_check
          %p400 = pneg %p120
        $region46: #{tpu_custom_call.1} parent=27 // pred_check_branch
          %402 = sbr.rel (%p400) target = $region48
        $region47: #{tpu_custom_call.1} parent=27 // pred_region
          _
        $region48: #{tpu_custom_call.1} parent=27 // pred_fallthru
          _
        // Predicated region
        $region49: #{tpu_custom_call.1} parent=27 // pred_check
          %p403 = pneg %p148
        $region50: #{tpu_custom_call.1} parent=27 // pred_check_branch
          %405 = sbr.rel (%p403) target = $region52
        $region51: #{tpu_custom_call.1} parent=27 // pred_region
          _
        $region52: #{tpu_custom_call.1} parent=27 // pred_fallthru
          _
      $region28: #{tpu_custom_call.1} parent=5 // pred_fallthru
        _
      %p406 = scmp.le.s32.totalorder 2, %s16
      // Predicated region
      $region53: #{tpu_custom_call.1} parent=5 // pred_check
        %p407 = pneg %p406
      $region54: #{tpu_custom_call.1} parent=5 // pred_check_branch
        %409 = sbr.rel (%p407) target = $region56
      $region55: #{tpu_custom_call.1} parent=5 // pred_region
        %s410 = ssub.s32 %s16, 2
        // Predicated region
        $region57: #{tpu_custom_call.1} parent=55 // pred_check
          %p411 = pneg %p126
        $region58: #{tpu_custom_call.1} parent=55 // pred_check_branch
          %413 = sbr.rel (%p411) target = $region60
        $region59: #{tpu_custom_call.1} parent=55 // pred_region
          %p414 = scmp.lt.s32.totalorder %s29, 0
          %s415 = scalar_select %p414, %s29, 0
          %p416 = scmp.lt.s32.totalorder %s30, 1
          %s417 = scalar_select %p416, %s30, 1
          %s418 = smul.addr %s415, 2
          %s419 = sadd.s32 %s417, %s418
          %s420 = smul.addr %s419, 4
          %s421 = scalar_lea.vmem %s2, %s420
        $region60: #{tpu_custom_call.1} parent=55 // pred_fallthru
          _
        // Predicated region
        $region61: #{tpu_custom_call.1} parent=55 // pred_check
          %p422 = pneg %p154
        $region62: #{tpu_custom_call.1} parent=55 // pred_check_branch
          %424 = sbr.rel (%p422) target = $region64
        $region63: #{tpu_custom_call.1} parent=55 // pred_region
          %p425 = scmp.lt.s32.totalorder %s29, 0
          %s426 = scalar_select %p425, %s29, 0
          %p427 = scmp.lt.s32.totalorder %s30, 1
          %s428 = scalar_select %p427, %s30, 1
          %s429 = smul.addr %s426, 2
          %s430 = sadd.s32 %s428, %s429
          %s431 = smul.addr %s430, 4
          %s432 = scalar_lea.vmem %s3, %s431
        $region64: #{tpu_custom_call.1} parent=55 // pred_fallthru
          _
      $region56: #{tpu_custom_call.1} parent=5 // pred_fallthru
        _
    $region6: #{tpu_custom_call.1} parent=1 // loop_footer
      %s20 = sadd.s32 1, %s16
    $region7: #{tpu_custom_call.1} parent=1 // loop_footer_branch
      %15 = sbr.rel target = $region3
    $region8: #{tpu_custom_call.1} parent=1 // loop_exit
      _
    %433 = vsyncpa [#allocation5], 1
    %s434 = scalar_lea.sflag [#allocation5], 1
    %435 = vsyncpa %s434, 1
    %436 = vsyncpa [#allocation7], 1
    %s437 = scalar_lea.sflag [#allocation7], 1
    %438 = vsyncpa %s437, 1

</llo_original>
